<compile_context>
chip_gen: v5e
topology: v5e:2x2
jax: 0.10.0
libtpu: 0.0.40
codegen_flags: <defaults>
</compile_context>

<pallas_src>
import functools

import jax
import jax.numpy as jnp
from jax.experimental import pallas as pl
from jax.experimental.pallas import tpu as pltpu


def _round_up(x, m):
    return (x + m - 1) // m * m


def _choose_tb(batch, block_batch):
    """Pick a batch-tile size.

    Large batches: 128-row granularity (keeps the transposed output block lane-legal and bf16
    sublane-legal), capped near block_batch, aiming for >= 4 grid tiles so both TensorCores are
    busy on v7x.  Tiny batches collapse to a single 16-row-aligned tile.
    """
    tb = min(block_batch, _round_up(pl.cdiv(batch, 4), 128))
    tb = _round_up(tb, 128)          # multi-tile => TB must be a multiple of 128
    if tb >= batch:                  # single tile: only the 16-row (bf16 sublane) rule applies
        tb = _round_up(batch, 16)
    return tb


def _gmf_kernel(b_ref, packed_ref, w_ref, out_ref, *, clip, dim, group):
    """One batch tile.

    b_ref      : (1,)        f32  SMEM (scalar prefetch)  -- affine bias
    packed_ref : (TB, Lp)    packed lane-dense slab [friend (C*D) | item (D) | fnum (1) | 0-pad]
    w_ref      : (1, D)      f32  affine weight row
    out_ref    : (R, TB)     f32, R = round_up(C+1, 8); rows [g_0..g_{C-1}, rating, 0-pad]
    """
    b = b_ref[0]
    w = w_ref[...]                                                    # (1, D)
    packed = packed_ref[...]                                          # (TB, Lp)

    friend = packed[:, :clip * dim].astype(jnp.float32)               # (TB, C*D)
    item = packed[:, clip * dim:clip * dim + dim].astype(jnp.float32)  # (TB, D)
    fnum = packed[:, clip * dim + dim:clip * dim + dim + 1].astype(jnp.float32)  # (TB, 1)

    iw = item * w                                                     # pre-multiply item by w once

    # Per-friend attention logits: s_c = <friend_c, item * w> + b  (static C unrolled)
    s_cols = []
    for c in range(clip):
        fc = friend[:, c * dim:(c + 1) * dim]                         # (TB, D) lane slice
        s_cols.append(jnp.sum(fc * iw, axis=-1, keepdims=True))
    s = jnp.concatenate(s_cols, axis=-1) + b                          # (TB, C)
    g = jax.nn.sigmoid(s)                                             # group_idx (squeezed)

    # Fused GMF head:
    #   logits = sum_d(user_emb * item * w) + b = (1/fnum) * sum_c weight_c * (s_c - b) + b
    contrib = g * (s - b) if group else (s - b)
    dot = jnp.sum(contrib, axis=-1, keepdims=True)                    # (TB, 1)
    logits = dot * pl.reciprocal(fnum) + b                            # exact reciprocal
    rating = jax.nn.sigmoid(logits)                                   # (TB, 1)

    rows = out_ref.shape[0]
    pad_cols = rows - (clip + 1)
    pieces = [g, rating]
    if pad_cols:
        pieces.append(jnp.zeros((g.shape[0], pad_cols), jnp.float32))
    # Single lane-dense store: (TB, R) -> (R, TB), batch on the lane axis (XLU transpose, idle slot).
    out_ref[...] = jnp.concatenate(pieces, axis=-1).T


def gmf_forward(user_indices, item_indices, params, group=True,
                block_batch=2048, transfer_dtype=jnp.bfloat16):
    """Full forward: index padding + gathers + packing in JAX/XLA, hot path in Pallas.

    Returns (rating (B,), group_idx (B, C, 1)), both float32.
    transfer_dtype=jnp.bfloat16 (default) halves HBM traffic for the packed slab; compute stays
    f32 inside the kernel.  Pass jnp.float32 for bit-level parity with the f32 reference.
    """
    ufi = params["user_friend_indices"]                  # (num_users, clip) int32
    emb_user_w = params["embedding_user"]                # (num_friends+1, D), pad row zeroed
    emb_item_w = params["embedding_item"]                # (num_items, D)
    w = params["affine_w"]                               # (1, D)
    b = params["affine_b"]                               # (1, 1)
    num_friends = params["num_friends"]

    B = int(user_indices.shape[0])
    clip = int(ufi.shape[1])
    D = int(emb_user_w.shape[1])

    TB = _choose_tb(B, block_batch)
    Bp = _round_up(B, TB)
    pad = Bp - B

    # Pad the tiny index vectors (not the big gathered tensors).
    ui = jnp.asarray(user_indices)
    ii = jnp.asarray(item_indices)
    if pad:
        ui = jnp.pad(ui, (0, pad))
        ii = jnp.pad(ii, (0, pad))

    friend_idx = ufi[ui]                                              # (Bp, C)
    friend_flat = emb_user_w[friend_idx.reshape(-1)].reshape(Bp, clip * D)  # flat gather -> (Bp, C*D)
    item = emb_item_w[ii]                                             # (Bp, D)
    fnum = (clip - (friend_idx == num_friends).sum(
        axis=1, keepdims=True)).astype(jnp.float32)                   # (Bp, 1)
    if pad:
        fnum = fnum.at[B:].set(1.0)                                   # keep padded rows finite

    # Single packed, lane-dense, (16,128)-aligned input slab.
    L = clip * D + D + 1
    Lp = _round_up(L, 128)
    parts = [friend_flat.astype(transfer_dtype),
             item.astype(transfer_dtype),
             fnum.astype(transfer_dtype)]
    if Lp > L:
        parts.append(jnp.zeros((Bp, Lp - L), transfer_dtype))
    packed = jnp.concatenate(parts, axis=-1)                          # (Bp, Lp)

    w2 = jnp.asarray(w, jnp.float32).reshape(1, D)
    b_smem = jnp.asarray(b, jnp.float32).reshape(1)                   # scalar prefetch -> SMEM

    R = _round_up(clip + 1, 8)                                        # sublane-aligned output rows
    kernel = functools.partial(_gmf_kernel, clip=clip, dim=D, group=group)

    out = pl.pallas_call(
        kernel,
        out_shape=jax.ShapeDtypeStruct((R, Bp), jnp.float32),
        grid_spec=pltpu.PrefetchScalarGridSpec(
            num_scalar_prefetch=1,                                    # b -> SMEM
            grid=(Bp // TB,),
            in_specs=[
                pl.BlockSpec((TB, Lp), lambda i, _: (i, 0)),          # packed slab
                pl.BlockSpec((1, D), lambda i, _: (0, 0)),            # affine weight (tiny, reused)
            ],
            out_specs=pl.BlockSpec((R, TB), lambda i, _: (0, i)),     # lane-dense transposed output
        ),
        compiler_params=pltpu.CompilerParams(
            dimension_semantics=("parallel",),                        # shard batch tiles across TCs
            vmem_limit_bytes=32 * 1024 * 1024,
        ),
    )(b_smem, packed, w2)

    rating = out[clip, :B]                                            # (B,)
    group_idx = out[:clip, :B].T[:, :, None]                          # (B, C, 1)
    return rating, group_idx


def gmf_reference(user_indices, item_indices, params, group=True):
    """Pure-JAX reference mirroring the PyTorch forward, for verification."""
    ufi = params["user_friend_indices"]
    emb_user_w = params["embedding_user"]
    emb_item_w = params["embedding_item"]
    w = params["affine_w"]
    b = params["affine_b"]
    num_friends = params["num_friends"]
    clip = ufi.shape[1]

    friend_indices = ufi[user_indices]
    friend_emb = emb_user_w[friend_indices]
    item_emb = emb_item_w[item_indices]
    friend_num = (clip - (friend_indices == num_friends).sum(
        axis=1, keepdims=True)).astype(jnp.float32)

    s = jnp.sum((item_emb[:, None, :] * friend_emb) * w[None, :, :], axis=-1) + b[0, 0]
    g = jax.nn.sigmoid(s)
    fe = friend_emb * g[:, :, None] if group else friend_emb
    user_emb = jnp.sum(fe, axis=1) / friend_num
    logits = jnp.sum((user_emb * item_emb) * w, axis=-1) + b[0, 0]
    return jax.nn.sigmoid(logits), g[:, :, None]


if __name__ == "__main__":
    # small, module-consistent config
    num_users, num_items, num_friends = 10, 15, 20
    latent_dim, clip, batch = 32, 4, 8

    key = jax.random.PRNGKey(0)
    k1, k2, k3, k4, k5, k6, k7, k8, k9, k10 = jax.random.split(key, 10)

    # deterministic parameter init (synthetic, not a checkpoint)
    emb_user_w = jax.random.normal(k1, (num_friends + 1, latent_dim), jnp.float32) * 0.1
    emb_user_w = emb_user_w.at[num_friends].set(0.0)     # padding_idx row is zeros
    emb_item_w = jax.random.normal(k2, (num_items, latent_dim), jnp.float32) * 0.1
    affine_w = jax.random.normal(k3, (1, latent_dim), jnp.float32) * 0.1
    affine_b = jax.random.normal(k8, (1, 1), jnp.float32) * 0.1   # nonzero bias exercised

    # user -> friend index table with padding (value == num_friends); col 0 always real
    real_friends = jax.random.randint(k4, (num_users, clip), 0, num_friends)
    pad_mask = jax.random.bernoulli(k5, 0.4, (num_users, clip))
    pad_mask = pad_mask.at[:, 0].set(False)              # at least one real friend per user
    user_friend_indices = jnp.where(pad_mask, num_friends, real_friends).astype(jnp.int32)

    params = dict(
        user_friend_indices=user_friend_indices,
        embedding_user=emb_user_w,
        embedding_item=emb_item_w,
        affine_w=affine_w,
        affine_b=affine_b,
        num_friends=num_friends,
    )

    user_indices = jax.random.randint(k6, (batch,), 0, num_users)
    item_indices = jax.random.randint(k7, (batch,), 0, num_items)

    # 1) default path: bf16 transfer, group=True (looser tolerance for the bf16 read)
    rating, group_idx = gmf_forward(user_indices, item_indices, params, group=True)
    rating = jax.block_until_ready(rating)
    group_idx = jax.block_until_ready(group_idx)
    rating_ref, gidx_ref = gmf_reference(user_indices, item_indices, params, group=True)
    assert rating.shape == (batch,) and group_idx.shape == (batch, clip, 1)
    assert jnp.allclose(rating, rating_ref, atol=1e-2, rtol=1e-2)
    assert jnp.allclose(group_idx, gidx_ref, atol=1e-2, rtol=1e-2)

    # 2) f32 transfer, tight parity, group=True
    rating_f32, gidx_f32 = gmf_forward(user_indices, item_indices, params, group=True,
                                       transfer_dtype=jnp.float32)
    rating_f32 = jax.block_until_ready(rating_f32)
    assert jnp.allclose(rating_f32, rating_ref, atol=1e-5, rtol=1e-5)
    assert jnp.allclose(gidx_f32, gidx_ref, atol=1e-5, rtol=1e-5)

    # 3) f32 transfer, group=False branch
    rating_ng, gidx_ng = gmf_forward(user_indices, item_indices, params, group=False,
                                     transfer_dtype=jnp.float32)
    rating_ng = jax.block_until_ready(rating_ng)
    rating_ng_ref, gidx_ng_ref = gmf_reference(user_indices, item_indices, params, group=False)
    assert jnp.allclose(rating_ng, rating_ng_ref, atol=1e-5, rtol=1e-5)
    assert jnp.allclose(gidx_ng, gidx_ng_ref, atol=1e-5, rtol=1e-5)

    # 4) multi-tile grid + batch padding path (B=300 -> TB=128, 3 tiles, 84 padded rows)
    big_batch = 300
    ui_big = jax.random.randint(k9, (big_batch,), 0, num_users)
    ii_big = jax.random.randint(k10, (big_batch,), 0, num_items)
    rating_big, gidx_big = gmf_forward(ui_big, ii_big, params, group=True,
                                       transfer_dtype=jnp.float32)
    rating_big = jax.block_until_ready(rating_big)
    rating_big_ref, gidx_big_ref = gmf_reference(ui_big, ii_big, params, group=True)
    assert rating_big.shape == (big_batch,) and gidx_big.shape == (big_batch, clip, 1)
    assert jnp.allclose(rating_big, rating_big_ref, atol=1e-5, rtol=1e-5)
    assert jnp.allclose(gidx_big, gidx_big_ref, atol=1e-5, rtol=1e-5)

    print("KERNEL_OK")
</pallas_src>

<mosaic_0001>
module attributes {stable_mosaic.version = 11 : i64} {
  func.func @_gmf_kernel(%arg0: i32, %arg1: memref<1xf32, #tpu.memory_space<smem>>, %arg2: memref<16x256xbf16, #tpu.memory_space<vmem>>, %arg3: memref<1x32xf32, #tpu.memory_space<vmem>>, %arg4: memref<8x16xf32, #tpu.memory_space<vmem>>) attributes {dimension_semantics = [#tpu.dimension_semantics<parallel>], iteration_bounds = array<i64: 1>, scalar_prefetch = 1 : i64, scratch_operands = 0 : i64, tpu.core_type = #tpu.core_type<tc>, window_params = [{transform_indices = @transform_0, window_bounds = array<i64: 16, 256>}, {pipeline_mode = #tpu.pipeline_mode<synchronous>, transform_indices = @transform_1, window_bounds = array<i64: 1, 32>}, {transform_indices = @transform_2, window_bounds = array<i64: 8, 16>}]} {
    %c0 = arith.constant 0 : index
    %0 = memref.load %arg1[%c0] : memref<1xf32, #tpu.memory_space<smem>>
    %c0_0 = arith.constant 0 : index
    %c0_1 = arith.constant 0 : index
    %1 = vector.load %arg3[%c0_0, %c0_1] : memref<1x32xf32, #tpu.memory_space<vmem>>, vector<1x32xf32>
    %c0_2 = arith.constant 0 : index
    %c0_3 = arith.constant 0 : index
    %2 = vector.load %arg2[%c0_2, %c0_3] : memref<16x256xbf16, #tpu.memory_space<vmem>>, vector<16x256xbf16>
    %3 = vector.extract_strided_slice %2 {offsets = [0, 0], sizes = [16, 128], strides = [1, 1]} : vector<16x256xbf16> to vector<16x128xbf16>
    %4 = arith.extf %3 : vector<16x128xbf16> to vector<16x128xf32>
    %5 = vector.extract_strided_slice %2 {offsets = [0, 128], sizes = [16, 32], strides = [1, 1]} : vector<16x256xbf16> to vector<16x32xbf16>
    %6 = arith.extf %5 : vector<16x32xbf16> to vector<16x32xf32>
    %7 = vector.extract_strided_slice %2 {offsets = [0, 160], sizes = [16, 1], strides = [1, 1]} : vector<16x256xbf16> to vector<16x1xbf16>
    %8 = arith.extf %7 : vector<16x1xbf16> to vector<16x1xf32>
    %9 = vector.broadcast %1 : vector<1x32xf32> to vector<16x32xf32>
    %10 = arith.mulf %6, %9 : vector<16x32xf32>
    %11 = vector.extract_strided_slice %4 {offsets = [0, 0], sizes = [16, 32], strides = [1, 1]} : vector<16x128xf32> to vector<16x32xf32>
    %12 = arith.mulf %11, %10 : vector<16x32xf32>
    %cst = arith.constant dense<0.000000e+00> : vector<16xf32>
    %13 = vector.multi_reduction <add>, %12, %cst [1] : vector<16x32xf32> to vector<16xf32>
    %14 = vector.shape_cast %13 : vector<16xf32> to vector<16x1xf32>
    %15 = vector.extract_strided_slice %4 {offsets = [0, 32], sizes = [16, 32], strides = [1, 1]} : vector<16x128xf32> to vector<16x32xf32>
    %16 = arith.mulf %15, %10 : vector<16x32xf32>
    %cst_4 = arith.constant dense<0.000000e+00> : vector<16xf32>
    %17 = vector.multi_reduction <add>, %16, %cst_4 [1] : vector<16x32xf32> to vector<16xf32>
    %18 = vector.shape_cast %17 : vector<16xf32> to vector<16x1xf32>
    %19 = vector.extract_strided_slice %4 {offsets = [0, 64], sizes = [16, 32], strides = [1, 1]} : vector<16x128xf32> to vector<16x32xf32>
    %20 = arith.mulf %19, %10 : vector<16x32xf32>
    %cst_5 = arith.constant dense<0.000000e+00> : vector<16xf32>
    %21 = vector.multi_reduction <add>, %20, %cst_5 [1] : vector<16x32xf32> to vector<16xf32>
    %22 = vector.shape_cast %21 : vector<16xf32> to vector<16x1xf32>
    %23 = vector.extract_strided_slice %4 {offsets = [0, 96], sizes = [16, 32], strides = [1, 1]} : vector<16x128xf32> to vector<16x32xf32>
    %24 = arith.mulf %23, %10 : vector<16x32xf32>
    %cst_6 = arith.constant dense<0.000000e+00> : vector<16xf32>
    %25 = vector.multi_reduction <add>, %24, %cst_6 [1] : vector<16x32xf32> to vector<16xf32>
    %26 = vector.shape_cast %25 : vector<16xf32> to vector<16x1xf32>
    %27 = tpu.concatenate %14, %18, %22, %26 in 1 : vector<16x1xf32>, vector<16x1xf32>, vector<16x1xf32>, vector<16x1xf32> -> vector<16x4xf32>
    %28 = vector.broadcast %0 : f32 to vector<16x4xf32>
    %29 = arith.addf %27, %28 : vector<16x4xf32>
    %30 = arith.negf %29 : vector<16x4xf32>
    %31 = math.exp %30 : vector<16x4xf32>
    %cst_7 = arith.constant 1.000000e+00 : f32
    %32 = vector.broadcast %cst_7 : f32 to vector<16x4xf32>
    %33 = arith.addf %32, %31 : vector<16x4xf32>
    %34 = arith.divf %32, %33 : vector<16x4xf32>
    %35 = vector.broadcast %0 : f32 to vector<16x4xf32>
    %36 = arith.subf %29, %35 : vector<16x4xf32>
    %37 = arith.mulf %34, %36 : vector<16x4xf32>
    %cst_8 = arith.constant dense<0.000000e+00> : vector<16xf32>
    %38 = vector.multi_reduction <add>, %37, %cst_8 [1] : vector<16x4xf32> to vector<16xf32>
    %39 = vector.shape_cast %38 : vector<16xf32> to vector<16x1xf32>
    %40 = tpu.reciprocal %8 : vector<16x1xf32> -> vector<16x1xf32>
    %41 = arith.mulf %39, %40 : vector<16x1xf32>
    %42 = vector.broadcast %0 : f32 to vector<16x1xf32>
    %43 = arith.addf %41, %42 : vector<16x1xf32>
    %44 = arith.negf %43 : vector<16x1xf32>
    %45 = math.exp %44 : vector<16x1xf32>
    %cst_9 = arith.constant 1.000000e+00 : f32
    %46 = vector.broadcast %cst_9 : f32 to vector<16x1xf32>
    %47 = arith.addf %46, %45 : vector<16x1xf32>
    %48 = arith.divf %46, %47 : vector<16x1xf32>
    %cst_10 = arith.constant 0.000000e+00 : f32
    %49 = vector.broadcast %cst_10 : f32 to vector<16x3xf32>
    %50 = tpu.concatenate %34, %48, %49 in 1 : vector<16x4xf32>, vector<16x1xf32>, vector<16x3xf32> -> vector<16x8xf32>
    %51 = tpu.transpose %50, [1, 0] : vector<16x8xf32> -> vector<8x16xf32>
    %c0_11 = arith.constant 0 : index
    %c0_12 = arith.constant 0 : index
    %52 = vector.load %arg4[%c0_11, %c0_12] : memref<8x16xf32, #tpu.memory_space<vmem>>, vector<8x16xf32>
    tpu.vector_store %arg4[%c0_11, %c0_12], %51 {strides = array<i32>} : memref<8x16xf32, #tpu.memory_space<vmem>>, vector<8x16xf32>,
    return
  }
  func.func @transform_0(%arg0: i32, %arg1: memref<1xf32, #tpu.memory_space<smem>>) -> (i32, i32) {
    %c0_i32 = arith.constant 0 : i32
    %c0_i32_0 = arith.constant 0 : i32
    return %arg0, %c0_i32 : i32, i32
  }
  func.func @transform_1(%arg0: i32, %arg1: memref<1xf32, #tpu.memory_space<smem>>) -> (i32, i32) {
    %c0_i32 = arith.constant 0 : i32
    %c0_i32_0 = arith.constant 0 : i32
    %c0_i32_1 = arith.constant 0 : i32
    return %c0_i32, %c0_i32_0 : i32, i32
  }
  func.func @transform_2(%arg0: i32, %arg1: memref<1xf32, #tpu.memory_space<smem>>) -> (i32, i32) {
    %c0_i32 = arith.constant 0 : i32
    %c0_i32_0 = arith.constant 0 : i32
    return %c0_i32, %arg0 : i32, i32
  }
}

</mosaic_0001>

<llo_original>
// kernel: tpu_custom_call.1
$region0: #{tpu_custom_call.1}
  #allocation0 [shape = 'u32[]', space=smem, size = 0x4, offset = 0x4, fixed_abs, tag = 'smem constant byte address 0x4 - core index']
  #allocation1 [shape = 'u32[72,128]{1,0:T(1,128)}', space=vmem, size = 0x9000, scoped, tag = 'internal scratch']
  #allocation2 [shape = 's32[1]{0}', space=sflag, size = 0x4, scoped, tag = 'scoped memory for tpu_custom_call.1']
  #allocation3 [shape = 'f32[1]{0:T(128)S(6)}', space=smem, size = 0x200, scoped, tag = 'prefetched SMEM operand 0']
  %s0 = inlined_call_operand.<no memory space> [shape: f32[1], index: 0, kind: input, shape index: {}]
  %s1 = inlined_call_operand.hbm [shape: bf16[16,256], index: 1, kind: input, shape index: {}]
  %s2 = inlined_call_operand.vmem [shape: f32[1,32], index: 2, kind: input, shape index: {}]
  %s3 = inlined_call_operand.hbm [shape: f32[8,16], index: 3, kind: output, shape index: {}]
  %s4 = sld [smem:[#allocation0]]
  $region22: #{tpu_custom_call.1} parent=0
    _
  %s6 = ssub.s32 1, %s4
  %s7 = scalar_select 0, %s6, %s4
  %8 = sst [smem:[#allocation3]] %s0
  $region1: #{tpu_custom_call.1} parent=0
    #allocation4 [shape = 'u8[8192]{0}', space=vmem, size = 0x2000, scoped, tag = 'input window, operand 1, single buffered']
    #allocation5 [shape = 's32[1]{0}', space=sflag, size = 0x4, scoped, tag = 'scoped memory for tpu_custom_call.1']
    #allocation6 [shape = 's32[1]{0}', space=sflag, size = 0x4, scoped, tag = 'scoped memory for tpu_custom_call.1']
    #allocation7 [shape = 'u8[4096]{0}', space=vmem, size = 0x1000, scoped, tag = 'output window, operand 0, single buffered']
    %9 = vsyncpa [#allocation5], 0
    %10 = vsyncpa [#allocation6], 0
    // Predicated region
    $region2: #{tpu_custom_call.1} parent=1 // pred_check
      _
    $region3: #{tpu_custom_call.1} parent=1 // pred_check_branch
      %12 = sbr.rel (0) target = $region5
    $region4: #{tpu_custom_call.1} parent=1 // pred_region
      %14 = vsyncadd [#allocation5], 0
      %s15 = sshll.u32 %s1, 4
      %s16 = int_to_ptr.hbm [resolvable:$true] %s15
      %s17 = sshll.u32 [#allocation4], 4
      %s18 = int_to_ptr.vmem [resolvable:$true] %s17
      %23 = dma.hbm_to_vmem [thread:$0]  %s16, 256, %s18, [#allocation5], 128, 128, 8
    $region5: #{tpu_custom_call.1} parent=1 // pred_fallthru
      _
    // Predicated region
    $region6: #{tpu_custom_call.1} parent=1 // pred_check
      _
    $region7: #{tpu_custom_call.1} parent=1 // pred_check_branch
      %25 = sbr.rel (0) target = $region9
    $region8: #{tpu_custom_call.1} parent=1 // pred_region
      _
    $region9: #{tpu_custom_call.1} parent=1 // pred_fallthru
      _
    // Predicated region
    $region10: #{tpu_custom_call.1} parent=1 // pred_check
      _
    $region11: #{tpu_custom_call.1} parent=1 // pred_check_branch
      %27 = sbr.rel (0) target = $region13
    $region12: #{tpu_custom_call.1} parent=1 // pred_region
      %29 = dma.done [#allocation5], 256
    $region13: #{tpu_custom_call.1} parent=1 // pred_fallthru
      _
    %s30 = sld [smem:[#allocation3]]
    %v31 = vld [vmem:[%s2] sm:$0x1]
    %v32 = vld [vmem:[#allocation4] sm:$0xff]
    %v33 = vld [vmem:[#allocation4 + $0x8] sm:$0xff]
    %v34 = vunpack.c.l.bf16 %v32
    %v35 = vunpack.c.l.bf16 %v33
    %v38 = vrot.slane %v32, 4
    %v39 = vrot.slane %v33, 4
    %v42 = vunpack.c.l.bf16 %v38
    %v43 = vunpack.c.l.bf16 %v39
    %44 = vrot.lane.b32.xlu0 %v32, 96
    %v45 = vpop.permute.xlu0 %44
    %46 = vrot.lane.b32.xlu0 %v33, 96
    %v47 = vpop.permute.xlu0 %46
    %v48 = vrot.slane %v45, 4
    %v49 = vrot.slane %v47, 4
    %v52 = vunpack.c.l.bf16 %v48
    %v53 = vunpack.c.l.bf16 %v49
    %v55 = vperm.slane %v31, 0
    %v57 = vmul.f32 %v42, %v55
    %v58 = vmul.f32 %v43, %v55
    %v59 = vmul.f32 %v34, %v57
    %v60 = vmul.f32 %v35, %v58
    %vm61 = vcmask 261120
    %v62 = vsel %vm61, %v59, 0.0
    %63 = vadd.xlane.f32.xlu0 %v62
    %v64 = vpop.xlane.xlu0 %63
    %v65 = vsel %vm61, %v60, 0.0
    %66 = vadd.xlane.f32.xlu0 %v65
    %v67 = vpop.xlane.xlu0 %66
    %70 = vrot.lane.b32.xlu0 %v57, 32
    %v71 = vpop.permute.xlu0 %70
    %72 = vrot.lane.b32.xlu0 %v58, 32
    %v73 = vpop.permute.xlu0 %72
    %v76 = vmul.f32 %v34, %v71
    %v77 = vmul.f32 %v35, %v73
    %80 = vrot.lane.b32.xlu0 %v76, 96
    %v81 = vpop.permute.xlu0 %80
    %82 = vrot.lane.b32.xlu0 %v77, 96
    %v83 = vpop.permute.xlu0 %82
    %v86 = vsel %vm61, %v81, 0.0
    %87 = vadd.xlane.f32.xlu0 %v86
    %v88 = vpop.xlane.xlu0 %87
    %v89 = vsel %vm61, %v83, 0.0
    %90 = vadd.xlane.f32.xlu0 %v89
    %v91 = vpop.xlane.xlu0 %90
    %92 = vrot.lane.b32.xlu0 %v57, 64
    %v93 = vpop.permute.xlu0 %92
    %94 = vrot.lane.b32.xlu0 %v58, 64
    %v95 = vpop.permute.xlu0 %94
    %v98 = vmul.f32 %v34, %v93
    %v99 = vmul.f32 %v35, %v95
    %102 = vrot.lane.b32.xlu0 %v98, 64
    %v103 = vpop.permute.xlu0 %102
    %104 = vrot.lane.b32.xlu0 %v99, 64
    %v105 = vpop.permute.xlu0 %104
    %v108 = vsel %vm61, %v103, 0.0
    %109 = vadd.xlane.f32.xlu0 %v108
    %v110 = vpop.xlane.xlu0 %109
    %v111 = vsel %vm61, %v105, 0.0
    %112 = vadd.xlane.f32.xlu0 %v111
    %v113 = vpop.xlane.xlu0 %112
    %114 = vrot.lane.b32.xlu0 %v57, 96
    %v115 = vpop.permute.xlu0 %114
    %116 = vrot.lane.b32.xlu0 %v58, 96
    %v117 = vpop.permute.xlu0 %116
    %v120 = vmul.f32 %v34, %v115
    %v121 = vmul.f32 %v35, %v117
    %124 = vrot.lane.b32.xlu0 %v120, 32
    %v125 = vpop.permute.xlu0 %124
    %126 = vrot.lane.b32.xlu0 %v121, 32
    %v127 = vpop.permute.xlu0 %126
    %v130 = vsel %vm61, %v125, 0.0
    %131 = vadd.xlane.f32.xlu0 %v130
    %v132 = vpop.xlane.xlu0 %131
    %v133 = vsel %vm61, %v127, 0.0
    %134 = vadd.xlane.f32.xlu0 %v133
    %v135 = vpop.xlane.xlu0 %134
    %vm136 = vcmask 7168
    %v137 = vsel %vm136, %v64, %v88
    %v138 = vsel %vm136, %v67, %v91
    %vm139 = vcmask 15360
    %v140 = vsel %vm139, %v137, %v110
    %v141 = vsel %vm139, %v138, %v113
    %vm142 = vcmask 23552
    %v143 = vsel %vm142, %v140, %v132
    %v144 = vsel %vm142, %v141, %v135
    %v145 = vstv %s30
    %v146 = vadd.f32 %v143, %v145
    %v147 = vadd.f32 %v144, %v145
    %v148 = vxor.u32 %v146, 2147483648
    %v149 = vxor.u32 %v147, 2147483648
    %v150 = vmul.f32 %v148, 1.442695
    %v151 = vpow.pop %v150
    %v152 = vmul.f32 %v149, 1.442695
    %v153 = vpow.pop %v152
    %v154 = vadd.f32 %v151, 1.0
    %v155 = vadd.f32 %v153, 1.0
    %v156 = vrcp.pop %v154
    %v157 = vmul.f32 %v154, %v156
    %v158 = vsub.f32 1.0, %v157
    %v159 = vmul.f32 %v156, %v158
    %v160 = vadd.f32 %v156, %v159
    %vm161 = vweird.f32 %v154
    %vm162 = vweird.f32 %v156
    %vm163 = vmor %vm161, %vm162
    %v164 = vsel %vm163, %v156, %v160
    %v165 = vand.u32 2147483647, %v154
    %vm166 = vcmp.eq.f32.partialorder %v165, 8.507059e+37
    %v167 = vand.u32 %v154, 2147483648
    %v168 = vor.u32 1.1754944e-38, %v167
    %v169 = vsel %vm166, %v168, %v164
    %v170 = vmul.f32 1.0, %v169
    %v171 = vrcp.pop %v155
    %v172 = vmul.f32 %v155, %v171
    %v173 = vsub.f32 1.0, %v172
    %v174 = vmul.f32 %v171, %v173
    %v175 = vadd.f32 %v171, %v174
    %vm176 = vweird.f32 %v155
    %vm177 = vweird.f32 %v171
    %vm178 = vmor %vm176, %vm177
    %v179 = vsel %vm178, %v171, %v175
    %v180 = vand.u32 2147483647, %v155
    %vm181 = vcmp.eq.f32.partialorder %v180, 8.507059e+37
    %v182 = vand.u32 %v155, 2147483648
    %v183 = vor.u32 1.1754944e-38, %v182
    %v184 = vsel %vm181, %v183, %v179
    %v185 = vmul.f32 1.0, %v184
    %v186 = vsub.f32 %v146, %v145
    %v187 = vsub.f32 %v147, %v145
    %v188 = vmul.f32 %v170, %v186
    %v189 = vmul.f32 %v185, %v187
    %vm190 = vcmask 31744
    %v191 = vsel %vm190, %v188, 0.0
    %192 = vadd.xlane.f32.xlu0 %v191
    %v193 = vpop.xlane.xlu0 %192
    %v194 = vsel %vm190, %v189, 0.0
    %195 = vadd.xlane.f32.xlu0 %v194
    %v196 = vpop.xlane.xlu0 %195
    %v197 = vrcp.pop %v52
    %v198 = vmul.f32 %v52, %v197
    %v199 = vsub.f32 1.0, %v198
    %v200 = vmul.f32 %v197, %v199
    %v201 = vadd.f32 %v197, %v200
    %vm202 = vweird.f32 %v52
    %vm203 = vweird.f32 %v197
    %vm204 = vmor %vm202, %vm203
    %v205 = vsel %vm204, %v197, %v201
    %v206 = vand.u32 2147483647, %v52
    %vm207 = vcmp.eq.f32.partialorder %v206, 8.507059e+37
    %v208 = vand.u32 %v52, 2147483648
    %v209 = vor.u32 1.1754944e-38, %v208
    %v210 = vsel %vm207, %v209, %v205
    %v211 = vrcp.pop %v53
    %v212 = vmul.f32 %v53, %v211
    %v213 = vsub.f32 1.0, %v212
    %v214 = vmul.f32 %v211, %v213
    %v215 = vadd.f32 %v211, %v214
    %vm216 = vweird.f32 %v53
    %vm217 = vweird.f32 %v211
    %vm218 = vmor %vm216, %vm217
    %v219 = vsel %vm218, %v211, %v215
    %v220 = vand.u32 2147483647, %v53
    %vm221 = vcmp.eq.f32.partialorder %v220, 8.507059e+37
    %v222 = vand.u32 %v53, 2147483648
    %v223 = vor.u32 1.1754944e-38, %v222
    %v224 = vsel %vm221, %v223, %v219
    %v225 = vmul.f32 %v193, %v210
    %v226 = vmul.f32 %v196, %v224
    %v227 = vadd.f32 %v225, %v145
    %v228 = vadd.f32 %v226, %v145
    %v229 = vxor.u32 %v227, 2147483648
    %v230 = vxor.u32 %v228, 2147483648
    %v231 = vmul.f32 %v229, 1.442695
    %v232 = vpow.pop %v231
    %v233 = vmul.f32 %v230, 1.442695
    %v234 = vpow.pop %v233
    %v235 = vadd.f32 %v232, 1.0
    %v236 = vadd.f32 %v234, 1.0
    %v237 = vrcp.pop %v235
    %v238 = vmul.f32 %v235, %v237
    %v239 = vsub.f32 1.0, %v238
    %v240 = vmul.f32 %v237, %v239
    %v241 = vadd.f32 %v237, %v240
    %vm242 = vweird.f32 %v235
    %vm243 = vweird.f32 %v237
    %vm244 = vmor %vm242, %vm243
    %v245 = vsel %vm244, %v237, %v241
    %v246 = vand.u32 2147483647, %v235
    %vm247 = vcmp.eq.f32.partialorder %v246, 8.507059e+37
    %v248 = vand.u32 %v235, 2147483648
    %v249 = vor.u32 1.1754944e-38, %v248
    %v250 = vsel %vm247, %v249, %v245
    %v251 = vmul.f32 1.0, %v250
    %v252 = vrcp.pop %v236
    %v253 = vmul.f32 %v236, %v252
    %v254 = vsub.f32 1.0, %v253
    %v255 = vmul.f32 %v252, %v254
    %v256 = vadd.f32 %v252, %v255
    %vm257 = vweird.f32 %v236
    %vm258 = vweird.f32 %v252
    %vm259 = vmor %vm257, %vm258
    %v260 = vsel %vm259, %v252, %v256
    %v261 = vand.u32 2147483647, %v236
    %vm262 = vcmp.eq.f32.partialorder %v261, 8.507059e+37
    %v263 = vand.u32 %v236, 2147483648
    %v264 = vor.u32 1.1754944e-38, %v263
    %v265 = vsel %vm262, %v264, %v260
    %v266 = vmul.f32 1.0, %v265
    %269 = vrot.lane.b32.xlu0 %v251, 4
    %v270 = vpop.permute.xlu0 %269
    %271 = vrot.lane.b32.xlu0 %v266, 4
    %v272 = vpop.permute.xlu0 %271
    %v275 = vsel %vm190, %v170, %v270
    %v276 = vsel %vm190, %v185, %v272
    %vm277 = vcmask 39936
    %v278 = vsel %vm277, %v275, 0.0
    %v279 = vsel %vm277, %v276, 0.0
    %280 = vxpose.xlu0.b32.start [1/16] %v278, 128
    %281 = vxpose.xlu0.b32.cont [2/16] %v279, 128
    %282 = vxpose.xlu0.b32.cont [3/16] 0.0, 128
    %283 = vxpose.xlu0.b32.cont [4/16] 0.0, 128
    %284 = vxpose.xlu0.b32.cont [5/16] 0.0, 128
    %285 = vxpose.xlu0.b32.cont [6/16] 0.0, 128
    %286 = vxpose.xlu0.b32.cont [7/16] 0.0, 128
    %287 = vxpose.xlu0.b32.cont [8/16] 0.0, 128
    %288 = vxpose.xlu0.b32.cont [9/16] 0.0, 128
    %289 = vxpose.xlu0.b32.cont [10/16] 0.0, 128
    %290 = vxpose.xlu0.b32.cont [11/16] 0.0, 128
    %291 = vxpose.xlu0.b32.cont [12/16] 0.0, 128
    %292 = vxpose.xlu0.b32.cont [13/16] 0.0, 128
    %293 = vxpose.xlu0.b32.cont [14/16] 0.0, 128
    %294 = vxpose.xlu0.b32.cont [15/16] 0.0, 128
    %295 = vxpose.xlu0.b32.end [16/16] 0.0, 128
    %v296 = vpop.trf.xlu0
    %v297 = vpop.trf.xlu0
    %v298 = vpop.trf.xlu0
    %v299 = vpop.trf.xlu0
    %v300 = vpop.trf.xlu0
    %v301 = vpop.trf.xlu0
    %v302 = vpop.trf.xlu0
    %v303 = vpop.trf.xlu0
    %v304 = vpop.trf.xlu0
    %v305 = vpop.trf.xlu0
    %v306 = vpop.trf.xlu0
    %v307 = vpop.trf.xlu0
    %v308 = vpop.trf.xlu0
    %v309 = vpop.trf.xlu0
    %v310 = vpop.trf.xlu0
    %v311 = vpop.trf.xlu0
    %vm312 = vcmask 130048
    %313 = vst.msk [vmem:[#allocation7] sm:$0xff] %vm312, %v296
    // Predicated region
    $region14: #{tpu_custom_call.1} parent=1 // pred_check
      _
    $region15: #{tpu_custom_call.1} parent=1 // pred_check_branch
      %315 = sbr.rel (0) target = $region17
    $region16: #{tpu_custom_call.1} parent=1 // pred_region
      %317 = vsyncadd [#allocation6], 0
      %s319 = sshll.u32 [#allocation7], 4
      %s320 = int_to_ptr.vmem [resolvable:$true] %s319
      %s321 = sshll.u32 %s3, 4
      %s322 = int_to_ptr.hbm [resolvable:$true] %s321
      %324 = dma.vmem_to_hbm [thread:$0]  %s320, 128, %s322, [#allocation6]
    $region17: #{tpu_custom_call.1} parent=1 // pred_fallthru
      _
    // Predicated region
    $region18: #{tpu_custom_call.1} parent=1 // pred_check
      _
    $region19: #{tpu_custom_call.1} parent=1 // pred_check_branch
      %326 = sbr.rel (0) target = $region21
    $region20: #{tpu_custom_call.1} parent=1 // pred_region
      %328 = dma.done [#allocation6], 128
    $region21: #{tpu_custom_call.1} parent=1 // pred_fallthru
      _
    %329 = vsyncpa [#allocation5], 1
    %330 = vsyncpa [#allocation6], 1

</llo_original>
